<compile_context>
chip_gen: v7x
topology: tpu7x:2x2x1
jax: 0.10.0
libtpu: 0.0.40
codegen_flags: <defaults>
</compile_context>

<pallas_src>
import functools

import numpy as np
import jax
import jax.numpy as jnp
from jax import lax
from jax.experimental import pallas as pl
from jax.experimental.pallas import tpu as pltpu


def _round_up(n, m):
    return ((n + m - 1) // m) * m


# ---------------------------------------------------------------------------
# Kernels
# ---------------------------------------------------------------------------

def _noisy_linear_train_kernel(x_ref,
                               wmu_hbm, wsig_hbm, weps_hbm,
                               bmu_ref, bsig_ref, beps_ref,
                               o_ref,
                               w_eff, stage, wsem, *, chunk):
    """Training-mode forward.

    Step 0: chunked, double-buffered combine of (mu + sigma*eps) from HBM into
    the persistent VMEM scratch w_eff.  Every step: one MXU matmul per batch
    tile against the resident weight; bias combine is a tiny per-step VPU op
    on pipelined (grid-invariant, DMA'd once) bias blocks.
    """

    @pl.when(pl.program_id(0) == 0)
    def _combine_once():
        srcs = (wmu_hbm, wsig_hbm, weps_hbm)
        n_chunks = w_eff.shape[0] // chunk  # static

        def start(c, slot):
            for idx, src in enumerate(srcs):
                pltpu.make_async_copy(src.at[pl.ds(c * chunk, chunk), :],
                                      stage.at[slot, idx],
                                      wsem.at[slot, idx]).start()

        def wait(c, slot):
            for idx, src in enumerate(srcs):
                pltpu.make_async_copy(src.at[pl.ds(c * chunk, chunk), :],
                                      stage.at[slot, idx],
                                      wsem.at[slot, idx]).wait()

        # Statically unrolled (DQN layers -> a handful of chunks).
        start(0, 0)
        for c in range(n_chunks):
            slot = c % 2
            if c + 1 < n_chunks:
                start(c + 1, 1 - slot)      # prefetch next chunk (both slots live)
            wait(c, slot)
            mu = stage[slot, 0]
            sig = stage[slot, 1]
            eps = stage[slot, 2]
            w_eff[pl.ds(c * chunk, chunk), :] = (mu + sig * eps).astype(w_eff.dtype)

    # x already arrives in the MXU operand dtype (cast folded into wrapper pad).
    y = lax.dot_general(x_ref[...], w_eff[...],
                        dimension_numbers=(((1,), (1,)), ((), ())),
                        preferred_element_type=jnp.float32)
    bias = bmu_ref[...] + bsig_ref[...] * beps_ref[...]   # (1, out_p), free filler
    o_ref[...] = (y + bias).astype(o_ref.dtype)


def _noisy_linear_eval_kernel(x_ref, wmu_hbm, bmu_ref, o_ref,
                              w_eff, *maybe_stage, chunk, cast_mxu):
    """Eval-mode forward: sigma/epsilon are never loaded at all."""

    @pl.when(pl.program_id(0) == 0)
    def _load_once():
        if not cast_mxu:
            pltpu.sync_copy(wmu_hbm, w_eff)           # one full DMA, no staging
        else:
            stage, wsem = maybe_stage
            n_chunks = w_eff.shape[0] // chunk

            def start(c, slot):
                pltpu.make_async_copy(wmu_hbm.at[pl.ds(c * chunk, chunk), :],
                                      stage.at[slot], wsem.at[slot]).start()

            def wait(c, slot):
                pltpu.make_async_copy(wmu_hbm.at[pl.ds(c * chunk, chunk), :],
                                      stage.at[slot], wsem.at[slot]).wait()

            start(0, 0)
            for c in range(n_chunks):
                slot = c % 2
                if c + 1 < n_chunks:
                    start(c + 1, 1 - slot)
                wait(c, slot)
                w_eff[pl.ds(c * chunk, chunk), :] = stage[slot].astype(w_eff.dtype)

    y = lax.dot_general(x_ref[...], w_eff[...],
                        dimension_numbers=(((1,), (1,)), ((), ())),
                        preferred_element_type=jnp.float32)
    o_ref[...] = (y + bmu_ref[...]).astype(o_ref.dtype)


# ---------------------------------------------------------------------------
# Wrapper
# ---------------------------------------------------------------------------

def _vmem_capacity_bytes():
    try:
        return int(pltpu.get_tpu_info().vmem_capacity_bytes)
    except Exception:
        return 64 * 1024 * 1024   # safe on every generation (v7x has 64 MiB/TC)


def noisy_linear(x, weight_mu, weight_sigma, weight_epsilon,
                 bias_mu, bias_sigma, bias_epsilon, *,
                 training=True, tb=256, mxu_dtype=None, combine_chunk=128):
    """NoisyLinear forward. x:[B,in], weight_*:[out,in], bias_*:[out] -> [B,out].

    tb:        batch tile (MXU M dim per grid step). 256 suits v6e/v7x 2x256^2
               MXUs; it is clamped to round_up(B, 8) for small batches.
    mxu_dtype: matmul operand dtype. jnp.bfloat16 is recommended on ALL
               generations (v5e's MXU is bf16-native; f32 matmuls decompose
               into multiple passes). The noise combine stays f32 on the VPU
               and accumulation is f32 either way. Default: parameter dtype.
    combine_chunk: rows of the weight combined per step-0 DMA chunk.
    """
    B, in_f = x.shape
    out_f, in_f2 = weight_mu.shape
    assert in_f2 == in_f
    assert tb % 8 == 0, "batch tile must be sublane (8) aligned"

    param_dtype = np.dtype(weight_mu.dtype)
    mxu_dtype = param_dtype if mxu_dtype is None else np.dtype(mxu_dtype)
    cast_mxu = mxu_dtype != param_dtype
    out_dtype = x.dtype

    # Lane-dense feature padding (128 multiples); batch is NOT padded -- the
    # ragged last block relies on Pallas' masked partial-block reads/writes.
    in_p = _round_up(in_f, 128)
    out_p = _round_up(out_f, 128)
    tb = max(8, min(tb, _round_up(B, 8)))
    grid = (pl.cdiv(B, tb),)

    chunk = combine_chunk if (out_p % combine_chunk == 0) else 128
    chunk = min(chunk, out_p)

    # x: pad K only if needed; fold the bf16 cast into the same (single) copy.
    xp = x
    if in_p != in_f:
        xp = jnp.pad(xp, ((0, 0), (0, in_p - in_f)))
    if np.dtype(xp.dtype) != mxu_dtype:
        xp = xp.astype(mxu_dtype)

    def pad_w(w):
        if w.shape == (out_p, in_p):
            return w
        return jnp.pad(w, ((0, out_p - out_f), (0, in_p - in_f)))

    def pad_b(b):
        b = b.reshape(1, out_f)
        if out_p == out_f:
            return b
        return jnp.pad(b, ((0, 0), (0, out_p - out_f)))

    x_spec = pl.BlockSpec((tb, in_p), lambda i: (i, 0))
    out_spec = pl.BlockSpec((tb, out_p), lambda i: (i, 0))
    # Grid-invariant bias blocks: DMA'd once by the pipeline, never re-fetched.
    b_spec = pl.BlockSpec((1, out_p), lambda i: (0, 0))
    # Weights stay in HBM; the kernel streams them into VMEM scratch on step 0.
    w_any = pl.BlockSpec(memory_space=pl.ANY)

    if training:
        kernel = functools.partial(_noisy_linear_train_kernel, chunk=chunk)
        inputs = (xp, pad_w(weight_mu), pad_w(weight_sigma),
                  pad_w(weight_epsilon),
                  pad_b(bias_mu), pad_b(bias_sigma), pad_b(bias_epsilon))
        in_specs = [x_spec, w_any, w_any, w_any, b_spec, b_spec, b_spec]
        scratch = [pltpu.VMEM((out_p, in_p), mxu_dtype),            # w_eff
                   pltpu.VMEM((2, 3, chunk, in_p), jnp.float32),    # combine staging
                   pltpu.SemaphoreType.DMA((2, 3))]
        stage_bytes = 2 * 3 * chunk * in_p * 4
        bias_pipe_bytes = 3 * 2 * out_p * 4
    else:
        kernel = functools.partial(_noisy_linear_eval_kernel,
                                   chunk=chunk, cast_mxu=cast_mxu)
        inputs = (xp, pad_w(weight_mu), pad_b(bias_mu))
        in_specs = [x_spec, w_any, b_spec]
        scratch = [pltpu.VMEM((out_p, in_p), mxu_dtype)]            # w_eff
        stage_bytes = 0
        if cast_mxu:
            scratch += [pltpu.VMEM((2, chunk, in_p), jnp.float32),
                        pltpu.SemaphoreType.DMA((2,))]
            stage_bytes = 2 * chunk * in_p * 4
        bias_pipe_bytes = 2 * out_p * 4

    # Explicit, generation-aware VMEM budget (leave headroom for Mosaic).
    mxu_item = int(mxu_dtype.itemsize)
    out_item = int(np.dtype(out_dtype).itemsize)
    est = (out_p * in_p * mxu_item          # persistent w_eff
           + stage_bytes                    # combine staging
           + bias_pipe_bytes                # pipelined bias blocks
           + 2 * tb * in_p * mxu_item       # x double buffer
           + 2 * tb * out_p * out_item)     # out double buffer
    usable = (_vmem_capacity_bytes() * 3) // 4
    vmem_limit = int(min(usable, max(est * 3 // 2, 32 * 1024 * 1024)))

    out = pl.pallas_call(
        kernel,
        out_shape=jax.ShapeDtypeStruct((B, out_p), out_dtype),
        grid_spec=pltpu.PrefetchScalarGridSpec(
            num_scalar_prefetch=0,
            grid=grid,
            in_specs=in_specs,
            out_specs=out_spec,
            scratch_shapes=scratch),
        compiler_params=pltpu.CompilerParams(
            # "arbitrary": w_eff is built on step 0 and reused by later steps,
            # so the batch axis must run sequentially on one core.  (See TODO
            # at top for the dual-TC / pre-combined-weight variant.)
            dimension_semantics=("arbitrary",),
            vmem_limit_bytes=vmem_limit),
    )(*inputs)
    return out[:, :out_f]


# ---------------------------------------------------------------------------
# Deterministic parameter / noise construction (mirrors NoisyLinear.__init__)
# ---------------------------------------------------------------------------

def _scale_noise(key, size):
    # torch: x = randn(size); x.sign() * sqrt(|x|)
    x = jax.random.normal(key, (size,), dtype=jnp.float32)
    return jnp.sign(x) * jnp.sqrt(jnp.abs(x))


def init_noisy_linear(key, in_features, out_features, sigma_init=0.5):
    k_wmu, k_bmu, k_ein, k_eout = jax.random.split(key, 4)
    mu_range = 1.0 / jnp.sqrt(jnp.float32(in_features))

    weight_mu = jax.random.uniform(k_wmu, (out_features, in_features),
                                   minval=-mu_range, maxval=mu_range,
                                   dtype=jnp.float32)
    weight_sigma = jnp.full((out_features, in_features),
                            sigma_init * mu_range, dtype=jnp.float32)
    bias_mu = jax.random.uniform(k_bmu, (out_features,),
                                 minval=-mu_range, maxval=mu_range,
                                 dtype=jnp.float32)
    bias_sigma = jnp.full((out_features,), sigma_init * mu_range,
                          dtype=jnp.float32)

    eps_in = _scale_noise(k_ein, in_features)
    eps_out = _scale_noise(k_eout, out_features)
    weight_epsilon = jnp.outer(eps_out, eps_in)     # epsilon_out.ger(epsilon_in)
    bias_epsilon = eps_out

    return dict(weight_mu=weight_mu, weight_sigma=weight_sigma,
                weight_epsilon=weight_epsilon, bias_mu=bias_mu,
                bias_sigma=bias_sigma, bias_epsilon=bias_epsilon)


def noisy_linear_ref(x, p, training=True):
    if training:
        w = p["weight_mu"] + p["weight_sigma"] * p["weight_epsilon"]
        b = p["bias_mu"] + p["bias_sigma"] * p["bias_epsilon"]
    else:
        w = p["weight_mu"]
        b = p["bias_mu"]
    return x @ w.T + b


if __name__ == "__main__":
    key = jax.random.PRNGKey(0)
    k_a, k_b, k_xa, k_xb = jax.random.split(key, 4)

    # --- Config A: small DQN-like layer, ragged batch, exact f32 path. ------
    in_a, out_a, batch_a = 32, 64, 20
    pa = init_noisy_linear(k_a, in_a, out_a, sigma_init=0.5)
    xa = jax.random.normal(k_xa, (batch_a, in_a), dtype=jnp.float32)
    args_a = (xa, pa["weight_mu"], pa["weight_sigma"], pa["weight_epsilon"],
              pa["bias_mu"], pa["bias_sigma"], pa["bias_epsilon"])

    ya = jax.block_until_ready(noisy_linear(*args_a, training=True))
    ya_ref = noisy_linear_ref(xa, pa, training=True)
    assert ya.shape == (batch_a, out_a)
    assert jnp.allclose(ya, ya_ref, atol=1e-4, rtol=1e-4), "A train f32 mismatch"

    ya_ev = jax.block_until_ready(noisy_linear(*args_a, training=False))
    assert jnp.allclose(ya_ev, noisy_linear_ref(xa, pa, training=False),
                        atol=1e-4, rtol=1e-4), "A eval f32 mismatch"

    # --- Config B: unaligned features, multi-chunk combine, multi-step grid,
    #     bf16 MXU operands (wrapper-side x cast), eval cast path too. -------
    in_b, out_b, batch_b = 160, 300, 300
    pb = init_noisy_linear(k_b, in_b, out_b, sigma_init=0.5)
    xb = jax.random.normal(k_xb, (batch_b, in_b), dtype=jnp.float32)
    args_b = (xb, pb["weight_mu"], pb["weight_sigma"], pb["weight_epsilon"],
              pb["bias_mu"], pb["bias_sigma"], pb["bias_epsilon"])

    yb = jax.block_until_ready(
        noisy_linear(*args_b, training=True, tb=128, mxu_dtype=jnp.bfloat16))
    yb_ref = noisy_linear_ref(xb, pb, training=True)
    assert yb.shape == (batch_b, out_b)
    assert jnp.allclose(yb, yb_ref, atol=5e-2, rtol=5e-2), "B train bf16 mismatch"

    yb_ev = jax.block_until_ready(
        noisy_linear(*args_b, training=False, tb=128, mxu_dtype=jnp.bfloat16))
    assert jnp.allclose(yb_ev, noisy_linear_ref(xb, pb, training=False),
                        atol=5e-2, rtol=5e-2), "B eval bf16 mismatch"

    print("KERNEL_OK")
</pallas_src>

<mosaic_0001>
module attributes {stable_mosaic.version = 11 : i64} {
  func.func @_noisy_linear_train_kernel(%arg0: i32, %arg1: memref<24x128xf32, #tpu.memory_space<vmem>>, %arg2: memref<128x128xf32, #tpu.memory_space<any>>, %arg3: memref<128x128xf32, #tpu.memory_space<any>>, %arg4: memref<128x128xf32, #tpu.memory_space<any>>, %arg5: memref<1x128xf32, #tpu.memory_space<vmem>>, %arg6: memref<1x128xf32, #tpu.memory_space<vmem>>, %arg7: memref<1x128xf32, #tpu.memory_space<vmem>>, %arg8: memref<24x128xf32, #tpu.memory_space<vmem>>, %arg9: memref<128x128xf32, #tpu.memory_space<vmem>>, %arg10: memref<2x3x128x128xf32, #tpu.memory_space<vmem>>, %arg11: memref<2x3x!tpu.dma_semaphore, #tpu.memory_space<semaphore_mem>>) attributes {dimension_semantics = [#tpu.dimension_semantics<arbitrary>], iteration_bounds = array<i64: 1>, scalar_prefetch = 0 : i64, scratch_operands = 3 : i64, tpu.core_type = #tpu.core_type<tc>, window_params = [{transform_indices = @transform_0, window_bounds = array<i64: 24, 128>}, {}, {}, {}, {pipeline_mode = #tpu.pipeline_mode<synchronous>, transform_indices = @transform_4, window_bounds = array<i64: 1, 128>}, {pipeline_mode = #tpu.pipeline_mode<synchronous>, transform_indices = @transform_5, window_bounds = array<i64: 1, 128>}, {pipeline_mode = #tpu.pipeline_mode<synchronous>, transform_indices = @transform_6, window_bounds = array<i64: 1, 128>}, {transform_indices = @transform_7, window_bounds = array<i64: 24, 128>}]} {
    %c0_i32 = arith.constant 0 : i32
    %0 = arith.cmpi eq, %arg0, %c0_i32 : i32
    %1 = arith.extui %0 : i1 to i32
    %c0_i32_0 = arith.constant 0 : i32
    %2 = arith.cmpi ne, %1, %c0_i32_0 : i32
    scf.if %2 {
      %c0_i32_12 = arith.constant 0 : i32
      %c0_i32_13 = arith.constant 0 : i32
      %c0_i32_14 = arith.constant 0 : i32
      %c0_i32_15 = arith.constant 0 : i32
      %c0_i32_16 = arith.constant 0 : i32
      %c0_i32_17 = arith.constant 0 : i32
      %14 = tpu.memref_slice %arg2[%c0_i32_16, %c0_i32_17] : memref<128x128xf32, #tpu.memory_space<any>> -> memref<128x128xf32, #tpu.memory_space<any>>
      %c0_i32_18 = arith.constant 0 : i32
      %c0_i32_19 = arith.constant 0 : i32
      %15 = tpu.memref_slice %arg10[%c0_i32_12, %c0_i32_13, %c0_i32_18, %c0_i32_19] : memref<2x3x128x128xf32, #tpu.memory_space<vmem>> -> memref<1x1x128x128xf32, #tpu.memory_space<vmem>>
      %16 = tpu.memref_squeeze %15 : memref<1x1x128x128xf32, #tpu.memory_space<vmem>> -> memref<128x128xf32, #tpu.memory_space<vmem>>
      %17 = tpu.memref_slice %arg11[%c0_i32_14, %c0_i32_15] : memref<2x3x!tpu.dma_semaphore, #tpu.memory_space<semaphore_mem>> -> memref<1x1x!tpu.dma_semaphore, #tpu.memory_space<semaphore_mem>>
      %18 = tpu.memref_squeeze %17 : memref<1x1x!tpu.dma_semaphore, #tpu.memory_space<semaphore_mem>> -> memref<!tpu.dma_semaphore, #tpu.memory_space<semaphore_mem>>
      tpu.enqueue_dma source(%14 : memref<128x128xf32, #tpu.memory_space<any>>) target(%16 : memref<128x128xf32, #tpu.memory_space<vmem>>) target_semaphore(%18 : memref<!tpu.dma_semaphore, #tpu.memory_space<semaphore_mem>>)
      %c0_i32_20 = arith.constant 0 : i32
      %c1_i32 = arith.constant 1 : i32
      %c0_i32_21 = arith.constant 0 : i32
      %c1_i32_22 = arith.constant 1 : i32
      %c0_i32_23 = arith.constant 0 : i32
      %c0_i32_24 = arith.constant 0 : i32
      %19 = tpu.memref_slice %arg3[%c0_i32_23, %c0_i32_24] : memref<128x128xf32, #tpu.memory_space<any>> -> memref<128x128xf32, #tpu.memory_space<any>>
      %c0_i32_25 = arith.constant 0 : i32
      %c0_i32_26 = arith.constant 0 : i32
      %20 = tpu.memref_slice %arg10[%c0_i32_20, %c1_i32, %c0_i32_25, %c0_i32_26] : memref<2x3x128x128xf32, #tpu.memory_space<vmem>> -> memref<1x1x128x128xf32, #tpu.memory_space<vmem>>
      %21 = tpu.memref_squeeze %20 : memref<1x1x128x128xf32, #tpu.memory_space<vmem>> -> memref<128x128xf32, #tpu.memory_space<vmem>>
      %22 = tpu.memref_slice %arg11[%c0_i32_21, %c1_i32_22] : memref<2x3x!tpu.dma_semaphore, #tpu.memory_space<semaphore_mem>> -> memref<1x1x!tpu.dma_semaphore, #tpu.memory_space<semaphore_mem>>
      %23 = tpu.memref_squeeze %22 : memref<1x1x!tpu.dma_semaphore, #tpu.memory_space<semaphore_mem>> -> memref<!tpu.dma_semaphore, #tpu.memory_space<semaphore_mem>>
      tpu.enqueue_dma source(%19 : memref<128x128xf32, #tpu.memory_space<any>>) target(%21 : memref<128x128xf32, #tpu.memory_space<vmem>>) target_semaphore(%23 : memref<!tpu.dma_semaphore, #tpu.memory_space<semaphore_mem>>)
      %c0_i32_27 = arith.constant 0 : i32
      %c2_i32 = arith.constant 2 : i32
      %c0_i32_28 = arith.constant 0 : i32
      %c2_i32_29 = arith.constant 2 : i32
      %c0_i32_30 = arith.constant 0 : i32
      %c0_i32_31 = arith.constant 0 : i32
      %24 = tpu.memref_slice %arg4[%c0_i32_30, %c0_i32_31] : memref<128x128xf32, #tpu.memory_space<any>> -> memref<128x128xf32, #tpu.memory_space<any>>
      %c0_i32_32 = arith.constant 0 : i32
      %c0_i32_33 = arith.constant 0 : i32
      %25 = tpu.memref_slice %arg10[%c0_i32_27, %c2_i32, %c0_i32_32, %c0_i32_33] : memref<2x3x128x128xf32, #tpu.memory_space<vmem>> -> memref<1x1x128x128xf32, #tpu.memory_space<vmem>>
      %26 = tpu.memref_squeeze %25 : memref<1x1x128x128xf32, #tpu.memory_space<vmem>> -> memref<128x128xf32, #tpu.memory_space<vmem>>
      %27 = tpu.memref_slice %arg11[%c0_i32_28, %c2_i32_29] : memref<2x3x!tpu.dma_semaphore, #tpu.memory_space<semaphore_mem>> -> memref<1x1x!tpu.dma_semaphore, #tpu.memory_space<semaphore_mem>>
      %28 = tpu.memref_squeeze %27 : memref<1x1x!tpu.dma_semaphore, #tpu.memory_space<semaphore_mem>> -> memref<!tpu.dma_semaphore, #tpu.memory_space<semaphore_mem>>
      tpu.enqueue_dma source(%24 : memref<128x128xf32, #tpu.memory_space<any>>) target(%26 : memref<128x128xf32, #tpu.memory_space<vmem>>) target_semaphore(%28 : memref<!tpu.dma_semaphore, #tpu.memory_space<semaphore_mem>>)
      %c0_i32_34 = arith.constant 0 : i32
      %c0_i32_35 = arith.constant 0 : i32
      %c0_i32_36 = arith.constant 0 : i32
      %c0_i32_37 = arith.constant 0 : i32
      %c0_i32_38 = arith.constant 0 : i32
      %c0_i32_39 = arith.constant 0 : i32
      %29 = tpu.memref_slice %arg2[%c0_i32_38, %c0_i32_39] : memref<128x128xf32, #tpu.memory_space<any>> -> memref<128x128xf32, #tpu.memory_space<any>>
      %c0_i32_40 = arith.constant 0 : i32
      %c0_i32_41 = arith.constant 0 : i32
      %30 = tpu.memref_slice %arg10[%c0_i32_34, %c0_i32_35, %c0_i32_40, %c0_i32_41] : memref<2x3x128x128xf32, #tpu.memory_space<vmem>> -> memref<1x1x128x128xf32, #tpu.memory_space<vmem>>
      %31 = tpu.memref_squeeze %30 : memref<1x1x128x128xf32, #tpu.memory_space<vmem>> -> memref<128x128xf32, #tpu.memory_space<vmem>>
      %32 = tpu.memref_slice %arg11[%c0_i32_36, %c0_i32_37] : memref<2x3x!tpu.dma_semaphore, #tpu.memory_space<semaphore_mem>> -> memref<1x1x!tpu.dma_semaphore, #tpu.memory_space<semaphore_mem>>
      %33 = tpu.memref_squeeze %32 : memref<1x1x!tpu.dma_semaphore, #tpu.memory_space<semaphore_mem>> -> memref<!tpu.dma_semaphore, #tpu.memory_space<semaphore_mem>>
      tpu.wait_dma2 semaphore(%33 : memref<!tpu.dma_semaphore, #tpu.memory_space<semaphore_mem>>) src(%29 : memref<128x128xf32, #tpu.memory_space<any>>) dst(%31 : memref<128x128xf32, #tpu.memory_space<vmem>>)
      %c0_i32_42 = arith.constant 0 : i32
      %c1_i32_43 = arith.constant 1 : i32
      %c0_i32_44 = arith.constant 0 : i32
      %c1_i32_45 = arith.constant 1 : i32
      %c0_i32_46 = arith.constant 0 : i32
      %c0_i32_47 = arith.constant 0 : i32
      %34 = tpu.memref_slice %arg3[%c0_i32_46, %c0_i32_47] : memref<128x128xf32, #tpu.memory_space<any>> -> memref<128x128xf32, #tpu.memory_space<any>>
      %c0_i32_48 = arith.constant 0 : i32
      %c0_i32_49 = arith.constant 0 : i32
      %35 = tpu.memref_slice %arg10[%c0_i32_42, %c1_i32_43, %c0_i32_48, %c0_i32_49] : memref<2x3x128x128xf32, #tpu.memory_space<vmem>> -> memref<1x1x128x128xf32, #tpu.memory_space<vmem>>
      %36 = tpu.memref_squeeze %35 : memref<1x1x128x128xf32, #tpu.memory_space<vmem>> -> memref<128x128xf32, #tpu.memory_space<vmem>>
      %37 = tpu.memref_slice %arg11[%c0_i32_44, %c1_i32_45] : memref<2x3x!tpu.dma_semaphore, #tpu.memory_space<semaphore_mem>> -> memref<1x1x!tpu.dma_semaphore, #tpu.memory_space<semaphore_mem>>
      %38 = tpu.memref_squeeze %37 : memref<1x1x!tpu.dma_semaphore, #tpu.memory_space<semaphore_mem>> -> memref<!tpu.dma_semaphore, #tpu.memory_space<semaphore_mem>>
      tpu.wait_dma2 semaphore(%38 : memref<!tpu.dma_semaphore, #tpu.memory_space<semaphore_mem>>) src(%34 : memref<128x128xf32, #tpu.memory_space<any>>) dst(%36 : memref<128x128xf32, #tpu.memory_space<vmem>>)
      %c0_i32_50 = arith.constant 0 : i32
      %c2_i32_51 = arith.constant 2 : i32
      %c0_i32_52 = arith.constant 0 : i32
      %c2_i32_53 = arith.constant 2 : i32
      %c0_i32_54 = arith.constant 0 : i32
      %c0_i32_55 = arith.constant 0 : i32
      %39 = tpu.memref_slice %arg4[%c0_i32_54, %c0_i32_55] : memref<128x128xf32, #tpu.memory_space<any>> -> memref<128x128xf32, #tpu.memory_space<any>>
      %c0_i32_56 = arith.constant 0 : i32
      %c0_i32_57 = arith.constant 0 : i32
      %40 = tpu.memref_slice %arg10[%c0_i32_50, %c2_i32_51, %c0_i32_56, %c0_i32_57] : memref<2x3x128x128xf32, #tpu.memory_space<vmem>> -> memref<1x1x128x128xf32, #tpu.memory_space<vmem>>
      %41 = tpu.memref_squeeze %40 : memref<1x1x128x128xf32, #tpu.memory_space<vmem>> -> memref<128x128xf32, #tpu.memory_space<vmem>>
      %42 = tpu.memref_slice %arg11[%c0_i32_52, %c2_i32_53] : memref<2x3x!tpu.dma_semaphore, #tpu.memory_space<semaphore_mem>> -> memref<1x1x!tpu.dma_semaphore, #tpu.memory_space<semaphore_mem>>
      %43 = tpu.memref_squeeze %42 : memref<1x1x!tpu.dma_semaphore, #tpu.memory_space<semaphore_mem>> -> memref<!tpu.dma_semaphore, #tpu.memory_space<semaphore_mem>>
      tpu.wait_dma2 semaphore(%43 : memref<!tpu.dma_semaphore, #tpu.memory_space<semaphore_mem>>) src(%39 : memref<128x128xf32, #tpu.memory_space<any>>) dst(%41 : memref<128x128xf32, #tpu.memory_space<vmem>>)
      %c0_58 = arith.constant 0 : index
      %c0_59 = arith.constant 0 : index
      %c0_60 = arith.constant 0 : index
      %c0_61 = arith.constant 0 : index
      %44 = vector.load %arg10[%c0_58, %c0_59, %c0_60, %c0_61] : memref<2x3x128x128xf32, #tpu.memory_space<vmem>>, vector<1x1x128x128xf32>
      %45 = vector.shape_cast %44 : vector<1x1x128x128xf32> to vector<128x128xf32>
      %c0_62 = arith.constant 0 : index
      %c1 = arith.constant 1 : index
      %c0_63 = arith.constant 0 : index
      %c0_64 = arith.constant 0 : index
      %46 = vector.load %arg10[%c0_62, %c1, %c0_63, %c0_64] : memref<2x3x128x128xf32, #tpu.memory_space<vmem>>, vector<1x1x128x128xf32>
      %47 = vector.shape_cast %46 : vector<1x1x128x128xf32> to vector<128x128xf32>
      %c0_65 = arith.constant 0 : index
      %c2 = arith.constant 2 : index
      %c0_66 = arith.constant 0 : index
      %c0_67 = arith.constant 0 : index
      %48 = vector.load %arg10[%c0_65, %c2, %c0_66, %c0_67] : memref<2x3x128x128xf32, #tpu.memory_space<vmem>>, vector<1x1x128x128xf32>
      %49 = vector.shape_cast %48 : vector<1x1x128x128xf32> to vector<128x128xf32>
      %50 = arith.mulf %47, %49 : vector<128x128xf32>
      %51 = arith.addf %45, %50 : vector<128x128xf32>
      %c0_68 = arith.constant 0 : index
      %c0_69 = arith.constant 0 : index
      %52 = vector.load %arg9[%c0_68, %c0_69] : memref<128x128xf32, #tpu.memory_space<vmem>>, vector<128x128xf32>
      tpu.vector_store %arg9[%c0_68, %c0_69], %51 {strides = array<i32>} : memref<128x128xf32, #tpu.memory_space<vmem>>, vector<128x128xf32>,
    } else {
    }
    %c0 = arith.constant 0 : index
    %c0_1 = arith.constant 0 : index
    %3 = vector.load %arg1[%c0, %c0_1] : memref<24x128xf32, #tpu.memory_space<vmem>>, vector<24x128xf32>
    %c0_2 = arith.constant 0 : index
    %c0_3 = arith.constant 0 : index
    %4 = vector.load %arg9[%c0_2, %c0_3] : memref<128x128xf32, #tpu.memory_space<vmem>>, vector<128x128xf32>
    %cst = arith.constant dense<0.000000e+00> : vector<24x128xf32>
    %5 = tpu.matmul %3, %4, %cst {dimension_numbers = #tpu.dot_dimension_numbers<[1], [1], [0], [0], [0, 0, 1, 0], [], []>} : vector<24x128xf32>, vector<128x128xf32>, vector<24x128xf32> -> vector<24x128xf32>
    %c0_4 = arith.constant 0 : index
    %c0_5 = arith.constant 0 : index
    %6 = vector.load %arg5[%c0_4, %c0_5] : memref<1x128xf32, #tpu.memory_space<vmem>>, vector<1x128xf32>
    %c0_6 = arith.constant 0 : index
    %c0_7 = arith.constant 0 : index
    %7 = vector.load %arg6[%c0_6, %c0_7] : memref<1x128xf32, #tpu.memory_space<vmem>>, vector<1x128xf32>
    %c0_8 = arith.constant 0 : index
    %c0_9 = arith.constant 0 : index
    %8 = vector.load %arg7[%c0_8, %c0_9] : memref<1x128xf32, #tpu.memory_space<vmem>>, vector<1x128xf32>
    %9 = arith.mulf %7, %8 : vector<1x128xf32>
    %10 = arith.addf %6, %9 : vector<1x128xf32>
    %11 = vector.broadcast %10 : vector<1x128xf32> to vector<24x128xf32>
    %12 = arith.addf %5, %11 : vector<24x128xf32>
    %c0_10 = arith.constant 0 : index
    %c0_11 = arith.constant 0 : index
    %13 = vector.load %arg8[%c0_10, %c0_11] : memref<24x128xf32, #tpu.memory_space<vmem>>, vector<24x128xf32>
    tpu.vector_store %arg8[%c0_10, %c0_11], %12 {strides = array<i32>} : memref<24x128xf32, #tpu.memory_space<vmem>>, vector<24x128xf32>,
    return
  }
  func.func @transform_0(%arg0: i32) -> (i32, i32) {
    %c0_i32 = arith.constant 0 : i32
    %c0_i32_0 = arith.constant 0 : i32
    return %arg0, %c0_i32 : i32, i32
  }
  func.func @transform_4(%arg0: i32) -> (i32, i32) {
    %c0_i32 = arith.constant 0 : i32
    %c0_i32_0 = arith.constant 0 : i32
    %c0_i32_1 = arith.constant 0 : i32
    return %c0_i32, %c0_i32_0 : i32, i32
  }
  func.func @transform_5(%arg0: i32) -> (i32, i32) {
    %c0_i32 = arith.constant 0 : i32
    %c0_i32_0 = arith.constant 0 : i32
    %c0_i32_1 = arith.constant 0 : i32
    return %c0_i32, %c0_i32_0 : i32, i32
  }
  func.func @transform_6(%arg0: i32) -> (i32, i32) {
    %c0_i32 = arith.constant 0 : i32
    %c0_i32_0 = arith.constant 0 : i32
    %c0_i32_1 = arith.constant 0 : i32
    return %c0_i32, %c0_i32_0 : i32, i32
  }
  func.func @transform_7(%arg0: i32) -> (i32, i32) {
    %c0_i32 = arith.constant 0 : i32
    %c0_i32_0 = arith.constant 0 : i32
    return %arg0, %c0_i32 : i32, i32
  }
}

</mosaic_0001>

<llo_original>
// kernel: tpu_custom_call.1
$region0: #{tpu_custom_call.1}
  #allocation0 [shape = 'u32[]', space=smem, size = 0x4, offset = 0x4, fixed_abs, tag = 'smem constant byte address 0x4 - core index']
  #allocation1 [shape = 'u32[144,128]{1,0:T(1,128)}', space=vmem, size = 0x12000, scoped, tag = 'internal scratch']
  #allocation2 [shape = 'f32[128,128]{1,0:T(8,128)}', space=vmem, size = 0x10000, scoped, tag = 'scratch operand']
  #allocation3 [shape = 'f32[2,3,128,128]{3,2,1,0:T(8,128)}', space=vmem, size = 0x60000, scoped, tag = 'scratch operand']
  #allocation4 [shape = 's32[6]{0}', space=sflag, size = 0x18, scoped, tag = 'scratch operand']
  #allocation9 [shape = 's32[]', space=sflag, size = 0x4, offset = 0, fixed_abs, tag = 'sflag constant byte address 0x0 - dummy sync flag']
  #allocation10 [shape = 's32[]', space=sflag, size = 0x4, offset = 0, fixed_abs, tag = 'sflag constant byte address 0x0 - dummy sync flag']
  #allocation11 [shape = 'u32[]', space=smem, size = 0x4, offset = 0x44, fixed_abs, tag = 'smem constant byte address 0x44 - assertion arg 0']
  #allocation12 [shape = 'u32[]', space=smem, size = 0x4, offset = 0x48, fixed_abs, tag = 'smem constant byte address 0x48 - assertion arg 1']
  #allocation13 [shape = 's32[]', space=sflag, size = 0x4, offset = 0, fixed_abs, tag = 'sflag constant byte address 0x0 - dummy sync flag']
  #allocation14 [shape = 's32[]', space=sflag, size = 0x4, offset = 0, fixed_abs, tag = 'sflag constant byte address 0x0 - dummy sync flag']
  #allocation15 [shape = 's32[]', space=sflag, size = 0x4, offset = 0, fixed_abs, tag = 'sflag constant byte address 0x0 - dummy sync flag']
  #allocation16 [shape = 's32[]', space=sflag, size = 0x4, offset = 0, fixed_abs, tag = 'sflag constant byte address 0x0 - dummy sync flag']
  %s0 = inlined_call_operand.hbm [shape: f32[20,128], index: 0, kind: input, shape index: {}]
  %s1 = inlined_call_operand.hbm [shape: f32[128,128], index: 1, kind: input, shape index: {}]
  %s2 = inlined_call_operand.hbm [shape: f32[128,128], index: 2, kind: input, shape index: {}]
  %s3 = inlined_call_operand.hbm [shape: f32[128,128], index: 3, kind: input, shape index: {}]
  %s4 = inlined_call_operand.vmem [shape: f32[1,128], index: 4, kind: input, shape index: {}]
  %s5 = inlined_call_operand.vmem [shape: f32[1,128], index: 5, kind: input, shape index: {}]
  %s6 = inlined_call_operand.vmem [shape: f32[1,128], index: 6, kind: input, shape index: {}]
  %s7 = inlined_call_operand.hbm [shape: f32[20,128], index: 7, kind: output, shape index: {}]
  %s8 = sld [smem:[#allocation0]]
  $region46: #{tpu_custom_call.1} parent=0
    _
  %s10 = ssub.s32 1, %s8
  %s11 = scalar_select 0, %s10, %s8
  $region1: #{tpu_custom_call.1} parent=0
    #allocation5 [shape = 'u8[12288]{0}', space=vmem, size = 0x3000, scoped, tag = 'input window, operand 0, single buffered']
    #allocation6 [shape = 's32[1]{0}', space=sflag, size = 0x4, scoped, tag = 'scoped memory for tpu_custom_call.1']
    #allocation7 [shape = 's32[1]{0}', space=sflag, size = 0x4, scoped, tag = 'scoped memory for tpu_custom_call.1']
    #allocation8 [shape = 'u8[12288]{0}', space=vmem, size = 0x3000, scoped, tag = 'output window, operand 0, single buffered']
    %12 = vsyncpa [#allocation6], 0
    %13 = vsyncpa [#allocation7], 0
    // Predicated region
    $region2: #{tpu_custom_call.1} parent=1 // pred_check
      _
    $region3: #{tpu_custom_call.1} parent=1 // pred_check_branch
      %15 = sbr.rel (0) target = $region5
    $region4: #{tpu_custom_call.1} parent=1 // pred_region
      %s17 = ssub.s32 384, 384
      %18 = vsyncadd [#allocation6], %s17
      %s19 = sshll.u32 [#allocation5], 4
      %s20 = int_to_ptr.vmem [resolvable:$true] %s19
      %25 = dma.hbm_to_vmem [thread:$0]  %s0, 384, %s20, [#allocation6], 128, 128, 8
    $region5: #{tpu_custom_call.1} parent=1 // pred_fallthru
      _
    // Predicated region
    $region6: #{tpu_custom_call.1} parent=1 // pred_check
      _
    $region7: #{tpu_custom_call.1} parent=1 // pred_check_branch
      %27 = sbr.rel (0) target = $region9
    $region8: #{tpu_custom_call.1} parent=1 // pred_region
      _
    $region9: #{tpu_custom_call.1} parent=1 // pred_fallthru
      _
    // Predicated region
    $region10: #{tpu_custom_call.1} parent=1 // pred_check
      _
    $region11: #{tpu_custom_call.1} parent=1 // pred_check_branch
      %29 = sbr.rel (0) target = $region13
    $region12: #{tpu_custom_call.1} parent=1 // pred_region
      _
    $region13: #{tpu_custom_call.1} parent=1 // pred_fallthru
      _
    // Predicated region
    $region14: #{tpu_custom_call.1} parent=1 // pred_check
      _
    $region15: #{tpu_custom_call.1} parent=1 // pred_check_branch
      %31 = sbr.rel (0) target = $region17
    $region16: #{tpu_custom_call.1} parent=1 // pred_region
      _
    $region17: #{tpu_custom_call.1} parent=1 // pred_fallthru
      _
    // Predicated region
    $region18: #{tpu_custom_call.1} parent=1 // pred_check
      _
    $region19: #{tpu_custom_call.1} parent=1 // pred_check_branch
      %33 = sbr.rel (0) target = $region21
    $region20: #{tpu_custom_call.1} parent=1 // pred_region
      %34 = dma.done [#allocation6], 384
    $region21: #{tpu_custom_call.1} parent=1 // pred_fallthru
      _
    %p35 = scmp.eq.s32.totalorder 0, 0
    // Predicated region
    $region22: #{tpu_custom_call.1} parent=1 // pred_check
      %p36 = pneg %p35
    $region23: #{tpu_custom_call.1} parent=1 // pred_check_branch
      %38 = sbr.rel (%p36) target = $region25
    $region24: #{tpu_custom_call.1} parent=1 // pred_region
      // Predicated region
      $region26: #{tpu_custom_call.1} parent=24 // pred_check
        _
      $region27: #{tpu_custom_call.1} parent=24 // pred_check_branch
        %40 = sbr.rel target = $region29
      $region28: #{tpu_custom_call.1} parent=24 // pred_region
        %41 = sst [smem:[#allocation11]] [#allocation10]
        %42 = sst [smem:[#allocation12]] [#allocation9]
      $region29: #{tpu_custom_call.1} parent=24 // pred_fallthru
        _
      %44 = shalt.err (0)
      %s46 = sshll.u32 [#allocation3], 4
      %s47 = int_to_ptr.vmem [resolvable:$true] %s46
      %49 = dma.hbm_to_vmem [thread:$0]  %s1, 2048, %s47, [#allocation4]
      %s50 = scalar_lea.vmem [#allocation3], 128
      %s51 = scalar_lea.sflag [#allocation4], 1
      // Predicated region
      $region30: #{tpu_custom_call.1} parent=24 // pred_check
        _
      $region31: #{tpu_custom_call.1} parent=24 // pred_check_branch
        %53 = sbr.rel target = $region33
      $region32: #{tpu_custom_call.1} parent=24 // pred_region
        %54 = sst [smem:[#allocation11]] [#allocation14]
        %55 = sst [smem:[#allocation12]] [#allocation13]
      $region33: #{tpu_custom_call.1} parent=24 // pred_fallthru
        _
      %57 = shalt.err (0)
      %s59 = sshll.u32 %s50, 4
      %s60 = int_to_ptr.vmem [resolvable:$true] %s59
      %62 = dma.hbm_to_vmem [thread:$0]  %s2, 2048, %s60, %s51
      %s63 = scalar_lea.vmem [#allocation3], 256
      %s64 = scalar_lea.sflag [#allocation4], 2
      // Predicated region
      $region34: #{tpu_custom_call.1} parent=24 // pred_check
        _
      $region35: #{tpu_custom_call.1} parent=24 // pred_check_branch
        %66 = sbr.rel target = $region37
      $region36: #{tpu_custom_call.1} parent=24 // pred_region
        %67 = sst [smem:[#allocation11]] [#allocation16]
        %68 = sst [smem:[#allocation12]] [#allocation15]
      $region37: #{tpu_custom_call.1} parent=24 // pred_fallthru
        _
      %70 = shalt.err (0)
      %s72 = sshll.u32 %s63, 4
      %s73 = int_to_ptr.vmem [resolvable:$true] %s72
      %75 = dma.hbm_to_vmem [thread:$0]  %s3, 2048, %s73, %s64
      %s76 = smul.u32 128, 1
      %s77 = sshll.u32 %s76, 4
      %78 = dma.done [#allocation4], %s77
      %s79 = sshll.u32 %s76, 4
      %80 = dma.done %s51, %s79
      %s81 = sshll.u32 %s76, 4
      %82 = dma.done %s64, %s81
      %v83 = vld [vmem:[#allocation3] sm:$0xff]
      %v84 = vld [vmem:[#allocation3 + $0x8] sm:$0xff]
      %v85 = vld [vmem:[#allocation3 + $0x10] sm:$0xff]
      %v86 = vld [vmem:[#allocation3 + $0x18] sm:$0xff]
      %v87 = vld [vmem:[#allocation3 + $0x20] sm:$0xff]
      %v88 = vld [vmem:[#allocation3 + $0x28] sm:$0xff]
      %v89 = vld [vmem:[#allocation3 + $0x30] sm:$0xff]
      %v90 = vld [vmem:[#allocation3 + $0x38] sm:$0xff]
      %v91 = vld [vmem:[#allocation3 + $0x40] sm:$0xff]
      %v92 = vld [vmem:[#allocation3 + $0x48] sm:$0xff]
      %v93 = vld [vmem:[#allocation3 + $0x50] sm:$0xff]
      %v94 = vld [vmem:[#allocation3 + $0x58] sm:$0xff]
      %v95 = vld [vmem:[#allocation3 + $0x60] sm:$0xff]
      %v96 = vld [vmem:[#allocation3 + $0x68] sm:$0xff]
      %v97 = vld [vmem:[#allocation3 + $0x70] sm:$0xff]
      %v98 = vld [vmem:[#allocation3 + $0x78] sm:$0xff]
      %v99 = vld [vmem:[%s50] sm:$0xff]
      %v100 = vld [vmem:[%s50 + $0x8] sm:$0xff]
      %v101 = vld [vmem:[%s50 + $0x10] sm:$0xff]
      %v102 = vld [vmem:[%s50 + $0x18] sm:$0xff]
      %v103 = vld [vmem:[%s50 + $0x20] sm:$0xff]
      %v104 = vld [vmem:[%s50 + $0x28] sm:$0xff]
      %v105 = vld [vmem:[%s50 + $0x30] sm:$0xff]
      %v106 = vld [vmem:[%s50 + $0x38] sm:$0xff]
      %v107 = vld [vmem:[%s50 + $0x40] sm:$0xff]
      %v108 = vld [vmem:[%s50 + $0x48] sm:$0xff]
      %v109 = vld [vmem:[%s50 + $0x50] sm:$0xff]
      %v110 = vld [vmem:[%s50 + $0x58] sm:$0xff]
      %v111 = vld [vmem:[%s50 + $0x60] sm:$0xff]
      %v112 = vld [vmem:[%s50 + $0x68] sm:$0xff]
      %v113 = vld [vmem:[%s50 + $0x70] sm:$0xff]
      %v114 = vld [vmem:[%s50 + $0x78] sm:$0xff]
      %v115 = vld [vmem:[%s63] sm:$0xff]
      %v116 = vld [vmem:[%s63 + $0x8] sm:$0xff]
      %v117 = vld [vmem:[%s63 + $0x10] sm:$0xff]
      %v118 = vld [vmem:[%s63 + $0x18] sm:$0xff]
      %v119 = vld [vmem:[%s63 + $0x20] sm:$0xff]
      %v120 = vld [vmem:[%s63 + $0x28] sm:$0xff]
      %v121 = vld [vmem:[%s63 + $0x30] sm:$0xff]
      %v122 = vld [vmem:[%s63 + $0x38] sm:$0xff]
      %v123 = vld [vmem:[%s63 + $0x40] sm:$0xff]
      %v124 = vld [vmem:[%s63 + $0x48] sm:$0xff]
      %v125 = vld [vmem:[%s63 + $0x50] sm:$0xff]
      %v126 = vld [vmem:[%s63 + $0x58] sm:$0xff]
      %v127 = vld [vmem:[%s63 + $0x60] sm:$0xff]
      %v128 = vld [vmem:[%s63 + $0x68] sm:$0xff]
      %v129 = vld [vmem:[%s63 + $0x70] sm:$0xff]
      %v130 = vld [vmem:[%s63 + $0x78] sm:$0xff]
      %v131 = vmul.f32 %v99, %v115
      %v132 = vmul.f32 %v100, %v116
      %v133 = vmul.f32 %v101, %v117
      %v134 = vmul.f32 %v102, %v118
      %v135 = vmul.f32 %v103, %v119
      %v136 = vmul.f32 %v104, %v120
      %v137 = vmul.f32 %v105, %v121
      %v138 = vmul.f32 %v106, %v122
      %v139 = vmul.f32 %v107, %v123
      %v140 = vmul.f32 %v108, %v124
      %v141 = vmul.f32 %v109, %v125
      %v142 = vmul.f32 %v110, %v126
      %v143 = vmul.f32 %v111, %v127
      %v144 = vmul.f32 %v112, %v128
      %v145 = vmul.f32 %v113, %v129
      %v146 = vmul.f32 %v114, %v130
      %v147 = vadd.f32 %v83, %v131
      %v148 = vadd.f32 %v84, %v132
      %v149 = vadd.f32 %v85, %v133
      %v150 = vadd.f32 %v86, %v134
      %v151 = vadd.f32 %v87, %v135
      %v152 = vadd.f32 %v88, %v136
      %v153 = vadd.f32 %v89, %v137
      %v154 = vadd.f32 %v90, %v138
      %v155 = vadd.f32 %v91, %v139
      %v156 = vadd.f32 %v92, %v140
      %v157 = vadd.f32 %v93, %v141
      %v158 = vadd.f32 %v94, %v142
      %v159 = vadd.f32 %v95, %v143
      %v160 = vadd.f32 %v96, %v144
      %v161 = vadd.f32 %v97, %v145
      %v162 = vadd.f32 %v98, %v146
      %163 = vst [vmem:[#allocation2] sm:$0xff] %v147
      %164 = vst [vmem:[#allocation2 + $0x8] sm:$0xff] %v148
      %165 = vst [vmem:[#allocation2 + $0x10] sm:$0xff] %v149
      %166 = vst [vmem:[#allocation2 + $0x18] sm:$0xff] %v150
      %167 = vst [vmem:[#allocation2 + $0x20] sm:$0xff] %v151
      %168 = vst [vmem:[#allocation2 + $0x28] sm:$0xff] %v152
      %169 = vst [vmem:[#allocation2 + $0x30] sm:$0xff] %v153
      %170 = vst [vmem:[#allocation2 + $0x38] sm:$0xff] %v154
      %171 = vst [vmem:[#allocation2 + $0x40] sm:$0xff] %v155
      %172 = vst [vmem:[#allocation2 + $0x48] sm:$0xff] %v156
      %173 = vst [vmem:[#allocation2 + $0x50] sm:$0xff] %v157
      %174 = vst [vmem:[#allocation2 + $0x58] sm:$0xff] %v158
      %175 = vst [vmem:[#allocation2 + $0x60] sm:$0xff] %v159
      %176 = vst [vmem:[#allocation2 + $0x68] sm:$0xff] %v160
      %177 = vst [vmem:[#allocation2 + $0x70] sm:$0xff] %v161
      %178 = vst [vmem:[#allocation2 + $0x78] sm:$0xff] %v162
    $region25: #{tpu_custom_call.1} parent=1 // pred_fallthru
      _
    %v179 = vld [vmem:[#allocation5] sm:$0xff]
    %v180 = vld [vmem:[#allocation5 + $0x8] sm:$0xff]
    %v181 = vld [vmem:[#allocation5 + $0x10] sm:$0xff]
    %v182 = vld [vmem:[#allocation2] sm:$0xff]
    %v183 = vld [vmem:[#allocation2 + $0x8] sm:$0xff]
    %v184 = vld [vmem:[#allocation2 + $0x10] sm:$0xff]
    %v185 = vld [vmem:[#allocation2 + $0x18] sm:$0xff]
    %v186 = vld [vmem:[#allocation2 + $0x20] sm:$0xff]
    %v187 = vld [vmem:[#allocation2 + $0x28] sm:$0xff]
    %v188 = vld [vmem:[#allocation2 + $0x30] sm:$0xff]
    %v189 = vld [vmem:[#allocation2 + $0x38] sm:$0xff]
    %v190 = vld [vmem:[#allocation2 + $0x40] sm:$0xff]
    %v191 = vld [vmem:[#allocation2 + $0x48] sm:$0xff]
    %v192 = vld [vmem:[#allocation2 + $0x50] sm:$0xff]
    %v193 = vld [vmem:[#allocation2 + $0x58] sm:$0xff]
    %v194 = vld [vmem:[#allocation2 + $0x60] sm:$0xff]
    %v195 = vld [vmem:[#allocation2 + $0x68] sm:$0xff]
    %v196 = vld [vmem:[#allocation2 + $0x70] sm:$0xff]
    %v197 = vld [vmem:[#allocation2 + $0x78] sm:$0xff]
    %v198 = vld [vmem:[%s4] sm:$0x1]
    %v199 = vld [vmem:[%s5] sm:$0x1]
    %v200 = vld [vmem:[%s6] sm:$0x1]
    %v201 = vmul.f32 %v199, %v200
    %v202 = vadd.f32 %v198, %v201
    %v204 = vlaneseq
    %v205 = vshrl.u32 %v204, 7
    %v206 = vsub.s32 0, %v205
    %v207 = vrot.slane %v202, %v206
    %209 = vmatprep.subr.mxu0 0.0
    %210 = vmatpush1.xpose.msra.mxu0 %v182
    %211 = vmatprep.subr.mxu0 0.0
    %212 = vmatpush1.xpose.msra.mxu0 %v183
    %213 = vmatprep.subr.mxu0 0.0
    %214 = vmatpush1.xpose.msra.mxu0 %v184
    %215 = vmatprep.subr.mxu0 0.0
    %216 = vmatpush1.xpose.msra.mxu0 %v185
    %217 = vmatprep.subr.mxu0 0.0
    %218 = vmatpush1.xpose.msra.mxu0 %v186
    %219 = vmatprep.subr.mxu0 0.0
    %220 = vmatpush1.xpose.msra.mxu0 %v187
    %221 = vmatprep.subr.mxu0 0.0
    %222 = vmatpush1.xpose.msra.mxu0 %v188
    %223 = vmatprep.subr.mxu0 0.0
    %224 = vmatpush1.xpose.msra.mxu0 %v189
    %225 = vmatprep.subr.mxu0 0.0
    %226 = vmatpush1.xpose.msra.mxu0 %v190
    %227 = vmatprep.subr.mxu0 0.0
    %228 = vmatpush1.xpose.msra.mxu0 %v191
    %229 = vmatprep.subr.mxu0 0.0
    %230 = vmatpush1.xpose.msra.mxu0 %v192
    %231 = vmatprep.subr.mxu0 0.0
    %232 = vmatpush1.xpose.msra.mxu0 %v193
    %233 = vmatprep.subr.mxu0 0.0
    %234 = vmatpush1.xpose.msra.mxu0 %v194
    %235 = vmatprep.subr.mxu0 0.0
    %236 = vmatpush1.xpose.msra.mxu0 %v195
    %237 = vmatprep.subr.mxu0 0.0
    %238 = vmatpush1.xpose.msra.mxu0 %v196
    %239 = vmatprep.subr.mxu0 0.0
    %240 = vmatpush1.xpose.msra.mxu0 %v197
    %241 = vmatprep.subr.mxu0 0.0
    %242 = vmatpush1.xpose.msra.mxu0 0.0
    %243 = vmatprep.subr.mxu0 0.0
    %244 = vmatpush1.xpose.msra.mxu0 0.0
    %245 = vmatprep.subr.mxu0 0.0
    %246 = vmatpush1.xpose.msra.mxu0 0.0
    %247 = vmatprep.subr.mxu0 0.0
    %248 = vmatpush1.xpose.msra.mxu0 0.0
    %249 = vmatprep.subr.mxu0 0.0
    %250 = vmatpush1.xpose.msra.mxu0 0.0
    %251 = vmatprep.subr.mxu0 0.0
    %252 = vmatpush1.xpose.msra.mxu0 0.0
    %253 = vmatprep.subr.mxu0 0.0
    %254 = vmatpush1.xpose.msra.mxu0 0.0
    %255 = vmatprep.subr.mxu0 0.0
    %256 = vmatpush1.xpose.msra.mxu0 0.0
    %257 = vmatprep.subr.mxu0 0.0
    %258 = vmatpush1.xpose.msra.mxu0 0.0
    %259 = vmatprep.subr.mxu0 0.0
    %260 = vmatpush1.xpose.msra.mxu0 0.0
    %261 = vmatprep.subr.mxu0 0.0
    %262 = vmatpush1.xpose.msra.mxu0 0.0
    %263 = vmatprep.subr.mxu0 0.0
    %264 = vmatpush1.xpose.msra.mxu0 0.0
    %265 = vmatprep.subr.mxu0 0.0
    %266 = vmatpush1.xpose.msra.mxu0 0.0
    %267 = vmatprep.subr.mxu0 0.0
    %268 = vmatpush1.xpose.msra.mxu0 0.0
    %269 = vmatprep.subr.mxu0 0.0
    %270 = vmatpush1.xpose.msra.mxu0 0.0
    %271 = vmatprep.subr.mxu0 0.0
    %272 = vmatpush1.xpose.msra.mxu0 0.0
    %273 = vmatprep.mubr.f32.mxu0 0.0
    %274 = vmatmul.mubr.f32.gmra.mrb[0].mxu0 %v179
    %v275 = vpop.f32.mrb[0].mxu0
    %v276 = vadd.f32 %v207, %v275
    %v277 = vpop.f32.mrb[0].mxu0
    %278 = vmatprep.mubr.f32.mxu0 0.0
    %279 = vmatmul.mubr.f32.gmra.mrb[0].mxu0 %v180
    %v280 = vpop.f32.mrb[0].mxu0
    %v281 = vadd.f32 %v207, %v280
    %v282 = vpop.f32.mrb[0].mxu0
    %283 = vmatprep.mubr.f32.mxu0 0.0
    %284 = vmatmul.mubr.f32.gmra.mrb[0].mxu0 %v181
    %v285 = vpop.f32.mrb[0].mxu0
    %v286 = vadd.f32 %v207, %v285
    %v287 = vpop.f32.mrb[0].mxu0
    %288 = vdwg.mxu0
    %289 = vst [vmem:[#allocation8] sm:$0xff] %v276
    %290 = vst [vmem:[#allocation8 + $0x8] sm:$0xff] %v281
    %291 = vst [vmem:[#allocation8 + $0x10] sm:$0xff] %v286
    // Predicated region
    $region38: #{tpu_custom_call.1} parent=1 // pred_check
      _
    $region39: #{tpu_custom_call.1} parent=1 // pred_check_branch
      %293 = sbr.rel (0) target = $region41
    $region40: #{tpu_custom_call.1} parent=1 // pred_region
      %s295 = ssub.s32 384, 384
      %296 = vsyncadd [#allocation7], %s295
      %s297 = sshll.u32 [#allocation8], 4
      %s298 = int_to_ptr.vmem [resolvable:$true] %s297
      %303 = dma.vmem_to_hbm [thread:$0]  %s298, 384, %s7, [#allocation7], 128, 128, 8
    $region41: #{tpu_custom_call.1} parent=1 // pred_fallthru
      _
    // Predicated region
    $region42: #{tpu_custom_call.1} parent=1 // pred_check
      _
    $region43: #{tpu_custom_call.1} parent=1 // pred_check_branch
      %305 = sbr.rel (0) target = $region45
    $region44: #{tpu_custom_call.1} parent=1 // pred_region
      %306 = dma.done [#allocation7], 384
    $region45: #{tpu_custom_call.1} parent=1 // pred_fallthru
      _
    %307 = vsyncpa [#allocation6], 1
    %308 = vsyncpa [#allocation7], 1
  %309 = vsyncmov [#allocation4]
  %s310 = vpop.sfrf %309
  %p311 = scmp.eq.s32.totalorder %s310, 0
  %p312 = pneg %p311
  %314 = shalt.err (%p312)
  %s315 = scalar_lea.sflag [#allocation4], 1
  %316 = vsyncmov %s315
  %s317 = vpop.sfrf %316
  %p318 = scmp.eq.s32.totalorder %s317, 0
  %p319 = pneg %p318
  %321 = shalt.err (%p319)
  %s322 = scalar_lea.sflag [#allocation4], 2
  %323 = vsyncmov %s322
  %s324 = vpop.sfrf %323
  %p325 = scmp.eq.s32.totalorder %s324, 0
  %p326 = pneg %p325
  %328 = shalt.err (%p326)
  %s329 = scalar_lea.sflag [#allocation4], 3
  %330 = vsyncmov %s329
  %s331 = vpop.sfrf %330
  %p332 = scmp.eq.s32.totalorder %s331, 0
  %p333 = pneg %p332
  %335 = shalt.err (%p333)
  %s336 = scalar_lea.sflag [#allocation4], 4
  %337 = vsyncmov %s336
  %s338 = vpop.sfrf %337
  %p339 = scmp.eq.s32.totalorder %s338, 0
  %p340 = pneg %p339
  %342 = shalt.err (%p340)
  %s343 = scalar_lea.sflag [#allocation4], 5
  %344 = vsyncmov %s343
  %s345 = vpop.sfrf %344
  %p346 = scmp.eq.s32.totalorder %s345, 0
  %p347 = pneg %p346
  %349 = shalt.err (%p347)

</llo_original>
